<compile_context>
chip_gen: v5e
topology: v5e:2x2
jax: 0.10.0
libtpu: 0.0.40
codegen_flags: <defaults>
</compile_context>

<pallas_src>
import math
import jax
import jax.numpy as jnp
from jax.experimental import pallas as pl
from jax.experimental.pallas import tpu as pltpu


def causal_self_attn_kernel(x_ref, wq_ref, wk_ref, wv_ref,
                            bq_ref, bk_ref, bv_ref,
                            wproj_ref, bproj_ref,
                            o_ref, acc_ref):
    h = pl.program_id(1)
    last_h = pl.num_programs(1) - 1

    x = x_ref[0]                                            # (T, C) bf16

    # Per-head Q/K/V projections: bf16 MXU inputs, f32 accumulation.
    # The 1/sqrt(D) attention scale is already folded into wq / bq.
    q = jnp.dot(x, wq_ref[0], preferred_element_type=jnp.float32) + bq_ref[0]
    k = jnp.dot(x, wk_ref[0], preferred_element_type=jnp.float32) + bk_ref[0]
    v = jnp.dot(x, wv_ref[0], preferred_element_type=jnp.float32) + bv_ref[0]

    # Scores: q @ k^T expressed via dot_general (no explicit transpose copy).
    att = jax.lax.dot_general(
        q.astype(jnp.bfloat16), k.astype(jnp.bfloat16),
        (((1,), (1,)), ((), ())),
        preferred_element_type=jnp.float32)                 # (T, T) f32

    T = att.shape[0]
    row = jax.lax.broadcasted_iota(jnp.int32, (T, T), 0)
    col = jax.lax.broadcasted_iota(jnp.int32, (T, T), 1)
    att = jnp.where(row >= col, att, -jnp.inf)              # causal masked_fill

    # Softmax in f32 (diagonal is never masked, so the row max is finite).
    m = jnp.max(att, axis=-1, keepdims=True)
    p = jnp.exp(att - m)
    denom = jnp.sum(p, axis=-1, keepdims=True)
    p = p * pl.reciprocal(denom, approx=True)               # EUP vrcp slot
    # TODO(synk): for long sequences (T >= ~1024) tile queries/keys with a
    # flash-style online-softmax KV loop instead of the full (T, T) block.

    y_h = jnp.dot(p.astype(jnp.bfloat16), v.astype(jnp.bfloat16),
                  preferred_element_type=jnp.float32)       # (T, D)

    # This head's contribution to the output projection.
    part = jnp.dot(y_h.astype(jnp.bfloat16), wproj_ref[0],
                   preferred_element_type=jnp.float32)      # (T, C)

    @pl.when(h == 0)
    def _init():
        acc_ref[...] = bproj_ref[...] + part                # (1, C) broadcast

    @pl.when(h > 0)
    def _accumulate():
        acc_ref[...] += part

    @pl.when(h == last_h)
    def _finalize():
        o_ref[0] = acc_ref[...].astype(o_ref.dtype)


def causal_self_attention(x, w_attn, b_attn, w_proj, b_proj, n_head):
    """x: (B, T, C) f32.  w_attn: (C, 3C) == c_attn.weight.T, b_attn: (3C,),
    w_proj: (C, C) == c_proj.weight.T, b_proj: (C,)."""
    B, T, C = x.shape
    H = n_head
    D = C // H
    scale = 1.0 / math.sqrt(D)

    # Split the fused QKV weight per head in the wrapper so the kernel never
    # slices the lane dimension of a (T, 3C) activation block.
    def per_head(w):                                        # (C, C) -> (H, C, D)
        return w.reshape(C, H, D).transpose(1, 0, 2)

    wq = per_head(w_attn[:, 0 * C:1 * C]) * scale           # fold 1/sqrt(D) in
    wk = per_head(w_attn[:, 1 * C:2 * C])
    wv = per_head(w_attn[:, 2 * C:3 * C])
    bq = (b_attn[0 * C:1 * C] * scale).reshape(H, 1, D)
    bk = b_attn[1 * C:2 * C].reshape(H, 1, D)
    bv = b_attn[2 * C:3 * C].reshape(H, 1, D)
    wproj = w_proj.reshape(H, D, C)                         # row h*D+d -> [h, d, :]
    bproj = b_proj.reshape(1, C)

    # bf16 inputs to every MXU matmul; biases / softmax stay f32.
    bf16 = jnp.bfloat16
    x_bf = x.astype(bf16)
    wq, wk, wv, wproj = (wq.astype(bf16), wk.astype(bf16),
                         wv.astype(bf16), wproj.astype(bf16))
    bq, bk, bv, bproj = (bq.astype(jnp.float32), bk.astype(jnp.float32),
                         bv.astype(jnp.float32), bproj.astype(jnp.float32))

    return pl.pallas_call(
        causal_self_attn_kernel,
        out_shape=jax.ShapeDtypeStruct((B, T, C), x.dtype),
        grid_spec=pltpu.PrefetchScalarGridSpec(
            num_scalar_prefetch=0,
            grid=(B, H),
            in_specs=[
                pl.BlockSpec((1, T, C), lambda b, h: (b, 0, 0)),   # x (resident over h)
                pl.BlockSpec((1, C, D), lambda b, h: (h, 0, 0)),   # wq
                pl.BlockSpec((1, C, D), lambda b, h: (h, 0, 0)),   # wk
                pl.BlockSpec((1, C, D), lambda b, h: (h, 0, 0)),   # wv
                pl.BlockSpec((1, 1, D), lambda b, h: (h, 0, 0)),   # bq
                pl.BlockSpec((1, 1, D), lambda b, h: (h, 0, 0)),   # bk
                pl.BlockSpec((1, 1, D), lambda b, h: (h, 0, 0)),   # bv
                pl.BlockSpec((1, D, C), lambda b, h: (h, 0, 0)),   # wproj
                pl.BlockSpec((1, C), lambda b, h: (0, 0)),         # bproj (resident)
            ],
            out_specs=pl.BlockSpec((1, T, C), lambda b, h: (b, 0, 0)),
            scratch_shapes=[pltpu.VMEM((T, C), jnp.float32)],
        ),
        compiler_params=pltpu.CompilerParams(
            # Batch axis parallel (2 TCs on v7x); head axis is the output-proj
            # reduction, so it must stay arbitrary.
            dimension_semantics=("parallel", "arbitrary"),
            vmem_limit_bytes=32 * 1024 * 1024,
        ),
    )(x_bf, wq, wk, wv, bq, bk, bv, wproj, bproj)


def reference_attention(x, w_attn, b_attn, w_proj, b_proj, n_head):
    """Pure-JAX f32 reference matching the PyTorch forward exactly."""
    B, T, C = x.shape
    D = C // n_head
    qkv = x @ w_attn + b_attn                               # (B, T, 3C)
    q, k, v = jnp.split(qkv, 3, axis=2)
    q = q.reshape(B, T, n_head, D).transpose(0, 2, 1, 3)
    k = k.reshape(B, T, n_head, D).transpose(0, 2, 1, 3)
    v = v.reshape(B, T, n_head, D).transpose(0, 2, 1, 3)
    att = (q @ k.transpose(0, 1, 3, 2)) * (1.0 / math.sqrt(D))
    mask = jnp.tril(jnp.ones((T, T), dtype=bool))
    att = jnp.where(mask[None, None], att, -jnp.inf)
    att = jax.nn.softmax(att, axis=-1)
    y = att @ v
    y = y.transpose(0, 2, 1, 3).reshape(B, T, C)
    return y @ w_proj + b_proj


if __name__ == "__main__":
    # Small config: block_size >= T, n_embd=32, n_head=4, B=2, T=8.
    B, T, C, n_head = 2, 8, 32, 4

    key = jax.random.PRNGKey(0)
    kx, k1, k2, k3, k4 = jax.random.split(key, 5)

    x = jax.random.normal(kx, (B, T, C), dtype=jnp.float32)

    # nn.Linear default init: U(-1/sqrt(fan_in), 1/sqrt(fan_in)), stored in
    # right-multiply layout (in_features, out_features).
    bound = 1.0 / math.sqrt(C)
    w_attn = jax.random.uniform(k1, (C, 3 * C), jnp.float32, -bound, bound)
    b_attn = jax.random.uniform(k2, (3 * C,), jnp.float32, -bound, bound)
    w_proj = jax.random.uniform(k3, (C, C), jnp.float32, -bound, bound)
    b_proj = jax.random.uniform(k4, (C,), jnp.float32, -bound, bound)

    out = causal_self_attention(x, w_attn, b_attn, w_proj, b_proj, n_head)
    out = jax.block_until_ready(out)

    ref = reference_attention(x, w_attn, b_attn, w_proj, b_proj, n_head)
    assert out.shape == (B, T, C)
    # bf16 MXU inputs + approx reciprocal => relaxed tolerance vs f32 ref.
    assert jnp.allclose(out, ref, atol=5e-2, rtol=5e-2), \
        f"max err {jnp.max(jnp.abs(out - ref))}"

    print("KERNEL_OK")
</pallas_src>

<mosaic_0001>
module attributes {stable_mosaic.version = 11 : i64} {
  func.func @causal_self_attn_kernel(%arg0: i32, %arg1: i32, %arg2: memref<1x8x32xbf16, #tpu.memory_space<vmem>>, %arg3: memref<1x32x8xbf16, #tpu.memory_space<vmem>>, %arg4: memref<1x32x8xbf16, #tpu.memory_space<vmem>>, %arg5: memref<1x32x8xbf16, #tpu.memory_space<vmem>>, %arg6: memref<1x1x8xf32, #tpu.memory_space<vmem>>, %arg7: memref<1x1x8xf32, #tpu.memory_space<vmem>>, %arg8: memref<1x1x8xf32, #tpu.memory_space<vmem>>, %arg9: memref<1x8x32xbf16, #tpu.memory_space<vmem>>, %arg10: memref<1x32xf32, #tpu.memory_space<vmem>>, %arg11: memref<1x8x32xf32, #tpu.memory_space<vmem>>, %arg12: memref<8x32xf32, #tpu.memory_space<vmem>>) attributes {dimension_semantics = [#tpu.dimension_semantics<parallel>, #tpu.dimension_semantics<arbitrary>], iteration_bounds = array<i64: 2, 4>, scalar_prefetch = 0 : i64, scratch_operands = 1 : i64, tpu.core_type = #tpu.core_type<tc>, window_params = [{transform_indices = @transform_0, window_bounds = array<i64: 1, 8, 32>}, {transform_indices = @transform_1, window_bounds = array<i64: 1, 32, 8>}, {transform_indices = @transform_2, window_bounds = array<i64: 1, 32, 8>}, {transform_indices = @transform_3, window_bounds = array<i64: 1, 32, 8>}, {transform_indices = @transform_4, window_bounds = array<i64: 1, 1, 8>}, {transform_indices = @transform_5, window_bounds = array<i64: 1, 1, 8>}, {transform_indices = @transform_6, window_bounds = array<i64: 1, 1, 8>}, {transform_indices = @transform_7, window_bounds = array<i64: 1, 8, 32>}, {pipeline_mode = #tpu.pipeline_mode<synchronous>, transform_indices = @transform_8, window_bounds = array<i64: 1, 32>}, {transform_indices = @transform_9, window_bounds = array<i64: 1, 8, 32>}]} {
    %c0 = arith.constant 0 : index
    %c0_0 = arith.constant 0 : index
    %c0_1 = arith.constant 0 : index
    %0 = vector.load %arg2[%c0, %c0_0, %c0_1] : memref<1x8x32xbf16, #tpu.memory_space<vmem>>, vector<1x8x32xbf16>
    %1 = vector.shape_cast %0 : vector<1x8x32xbf16> to vector<8x32xbf16>
    %c0_2 = arith.constant 0 : index
    %c0_3 = arith.constant 0 : index
    %c0_4 = arith.constant 0 : index
    %2 = vector.load %arg3[%c0_2, %c0_3, %c0_4] : memref<1x32x8xbf16, #tpu.memory_space<vmem>>, vector<1x32x8xbf16>
    %3 = vector.shape_cast %2 : vector<1x32x8xbf16> to vector<32x8xbf16>
    %cst = arith.constant dense<0.000000e+00> : vector<8x8xf32>
    %4 = tpu.matmul %1, %3, %cst {dimension_numbers = #tpu.dot_dimension_numbers<[1], [0], [0], [1], [0, 0, 1, 1], [], []>} : vector<8x32xbf16>, vector<32x8xbf16>, vector<8x8xf32> -> vector<8x8xf32>
    %c0_5 = arith.constant 0 : index
    %c0_6 = arith.constant 0 : index
    %c0_7 = arith.constant 0 : index
    %5 = vector.load %arg6[%c0_5, %c0_6, %c0_7] : memref<1x1x8xf32, #tpu.memory_space<vmem>>, vector<1x1x8xf32>
    %6 = vector.shape_cast %5 : vector<1x1x8xf32> to vector<1x8xf32>
    %7 = vector.broadcast %6 : vector<1x8xf32> to vector<8x8xf32>
    %8 = arith.addf %4, %7 : vector<8x8xf32>
    %c0_8 = arith.constant 0 : index
    %c0_9 = arith.constant 0 : index
    %c0_10 = arith.constant 0 : index
    %9 = vector.load %arg4[%c0_8, %c0_9, %c0_10] : memref<1x32x8xbf16, #tpu.memory_space<vmem>>, vector<1x32x8xbf16>
    %10 = vector.shape_cast %9 : vector<1x32x8xbf16> to vector<32x8xbf16>
    %cst_11 = arith.constant dense<0.000000e+00> : vector<8x8xf32>
    %11 = tpu.matmul %1, %10, %cst_11 {dimension_numbers = #tpu.dot_dimension_numbers<[1], [0], [0], [1], [0, 0, 1, 1], [], []>} : vector<8x32xbf16>, vector<32x8xbf16>, vector<8x8xf32> -> vector<8x8xf32>
    %c0_12 = arith.constant 0 : index
    %c0_13 = arith.constant 0 : index
    %c0_14 = arith.constant 0 : index
    %12 = vector.load %arg7[%c0_12, %c0_13, %c0_14] : memref<1x1x8xf32, #tpu.memory_space<vmem>>, vector<1x1x8xf32>
    %13 = vector.shape_cast %12 : vector<1x1x8xf32> to vector<1x8xf32>
    %14 = vector.broadcast %13 : vector<1x8xf32> to vector<8x8xf32>
    %15 = arith.addf %11, %14 : vector<8x8xf32>
    %c0_15 = arith.constant 0 : index
    %c0_16 = arith.constant 0 : index
    %c0_17 = arith.constant 0 : index
    %16 = vector.load %arg5[%c0_15, %c0_16, %c0_17] : memref<1x32x8xbf16, #tpu.memory_space<vmem>>, vector<1x32x8xbf16>
    %17 = vector.shape_cast %16 : vector<1x32x8xbf16> to vector<32x8xbf16>
    %cst_18 = arith.constant dense<0.000000e+00> : vector<8x8xf32>
    %18 = tpu.matmul %1, %17, %cst_18 {dimension_numbers = #tpu.dot_dimension_numbers<[1], [0], [0], [1], [0, 0, 1, 1], [], []>} : vector<8x32xbf16>, vector<32x8xbf16>, vector<8x8xf32> -> vector<8x8xf32>
    %c0_19 = arith.constant 0 : index
    %c0_20 = arith.constant 0 : index
    %c0_21 = arith.constant 0 : index
    %19 = vector.load %arg8[%c0_19, %c0_20, %c0_21] : memref<1x1x8xf32, #tpu.memory_space<vmem>>, vector<1x1x8xf32>
    %20 = vector.shape_cast %19 : vector<1x1x8xf32> to vector<1x8xf32>
    %21 = vector.broadcast %20 : vector<1x8xf32> to vector<8x8xf32>
    %22 = arith.addf %18, %21 : vector<8x8xf32>
    %23 = arith.truncf %8 : vector<8x8xf32> to vector<8x8xbf16>
    %24 = arith.truncf %15 : vector<8x8xf32> to vector<8x8xbf16>
    %cst_22 = arith.constant dense<0.000000e+00> : vector<8x8xf32>
    %25 = tpu.matmul %23, %24, %cst_22 {dimension_numbers = #tpu.dot_dimension_numbers<[1], [1], [0], [0], [0, 0, 1, 0], [], []>} : vector<8x8xbf16>, vector<8x8xbf16>, vector<8x8xf32> -> vector<8x8xf32>
    %26 = tpu.iota {dimensions = array<i32: 0>} : vector<8x8xi32>
    %27 = tpu.iota {dimensions = array<i32: 1>} : vector<8x8xi32>
    %28 = arith.cmpi sge, %26, %27 : vector<8x8xi32>
    %cst_23 = arith.constant 0xFF800000 : f32
    %29 = vector.broadcast %cst_23 : f32 to vector<8x8xf32>
    %30 = arith.select %28, %25, %29 : vector<8x8xi1>, vector<8x8xf32>
    %cst_24 = arith.constant dense<0xFF800000> : vector<8xf32>
    %31 = vector.multi_reduction <maximumf>, %30, %cst_24 [1] : vector<8x8xf32> to vector<8xf32>
    %32 = vector.shape_cast %31 : vector<8xf32> to vector<8x1xf32>
    %33 = vector.broadcast %32 : vector<8x1xf32> to vector<8x8xf32>
    %34 = arith.subf %30, %33 : vector<8x8xf32>
    %35 = math.exp %34 : vector<8x8xf32>
    %cst_25 = arith.constant dense<0.000000e+00> : vector<8xf32>
    %36 = vector.multi_reduction <add>, %35, %cst_25 [1] : vector<8x8xf32> to vector<8xf32>
    %37 = vector.shape_cast %36 : vector<8xf32> to vector<8x1xf32>
    %38 = tpu.reciprocal %37 {approx = true} : vector<8x1xf32> -> vector<8x1xf32>
    %39 = vector.broadcast %38 : vector<8x1xf32> to vector<8x8xf32>
    %40 = arith.mulf %35, %39 : vector<8x8xf32>
    %41 = arith.truncf %40 : vector<8x8xf32> to vector<8x8xbf16>
    %42 = arith.truncf %22 : vector<8x8xf32> to vector<8x8xbf16>
    %cst_26 = arith.constant dense<0.000000e+00> : vector<8x8xf32>
    %43 = tpu.matmul %41, %42, %cst_26 {dimension_numbers = #tpu.dot_dimension_numbers<[1], [0], [0], [1], [0, 0, 1, 1], [], []>} : vector<8x8xbf16>, vector<8x8xbf16>, vector<8x8xf32> -> vector<8x8xf32>
    %44 = arith.truncf %43 : vector<8x8xf32> to vector<8x8xbf16>
    %c0_27 = arith.constant 0 : index
    %c0_28 = arith.constant 0 : index
    %c0_29 = arith.constant 0 : index
    %45 = vector.load %arg9[%c0_27, %c0_28, %c0_29] : memref<1x8x32xbf16, #tpu.memory_space<vmem>>, vector<1x8x32xbf16>
    %46 = vector.shape_cast %45 : vector<1x8x32xbf16> to vector<8x32xbf16>
    %cst_30 = arith.constant dense<0.000000e+00> : vector<8x32xf32>
    %47 = tpu.matmul %44, %46, %cst_30 {dimension_numbers = #tpu.dot_dimension_numbers<[1], [0], [0], [1], [0, 0, 1, 1], [], []>} : vector<8x8xbf16>, vector<8x32xbf16>, vector<8x32xf32> -> vector<8x32xf32>
    %c0_i32 = arith.constant 0 : i32
    %48 = arith.cmpi eq, %arg1, %c0_i32 : i32
    %49 = arith.extui %48 : i1 to i32
    %c0_i32_31 = arith.constant 0 : i32
    %50 = arith.cmpi ne, %49, %c0_i32_31 : i32
    scf.if %50 {
      %c0_35 = arith.constant 0 : index
      %c0_36 = arith.constant 0 : index
      %57 = vector.load %arg10[%c0_35, %c0_36] : memref<1x32xf32, #tpu.memory_space<vmem>>, vector<1x32xf32>
      %58 = vector.broadcast %57 : vector<1x32xf32> to vector<8x32xf32>
      %59 = arith.addf %58, %47 : vector<8x32xf32>
      %c0_37 = arith.constant 0 : index
      %c0_38 = arith.constant 0 : index
      %60 = vector.load %arg12[%c0_37, %c0_38] : memref<8x32xf32, #tpu.memory_space<vmem>>, vector<8x32xf32>
      tpu.vector_store %arg12[%c0_37, %c0_38], %59 {strides = array<i32>} : memref<8x32xf32, #tpu.memory_space<vmem>>, vector<8x32xf32>,
    } else {
    }
    %c0_i32_32 = arith.constant 0 : i32
    %51 = arith.cmpi sgt, %arg1, %c0_i32_32 : i32
    %52 = arith.extui %51 : i1 to i32
    %c0_i32_33 = arith.constant 0 : i32
    %53 = arith.cmpi ne, %52, %c0_i32_33 : i32
    scf.if %53 {
      %c0_35 = arith.constant 0 : index
      %c0_36 = arith.constant 0 : index
      %57 = vector.load %arg12[%c0_35, %c0_36] : memref<8x32xf32, #tpu.memory_space<vmem>>, vector<8x32xf32>
      %58 = arith.addf %57, %47 : vector<8x32xf32>
      %c0_37 = arith.constant 0 : index
      %c0_38 = arith.constant 0 : index
      %59 = vector.load %arg12[%c0_37, %c0_38] : memref<8x32xf32, #tpu.memory_space<vmem>>, vector<8x32xf32>
      tpu.vector_store %arg12[%c0_37, %c0_38], %58 {strides = array<i32>} : memref<8x32xf32, #tpu.memory_space<vmem>>, vector<8x32xf32>,
    } else {
    }
    %c3_i32 = arith.constant 3 : i32
    %54 = arith.cmpi eq, %arg1, %c3_i32 : i32
    %55 = arith.extui %54 : i1 to i32
    %c0_i32_34 = arith.constant 0 : i32
    %56 = arith.cmpi ne, %55, %c0_i32_34 : i32
    scf.if %56 {
      %c0_35 = arith.constant 0 : index
      %c0_36 = arith.constant 0 : index
      %57 = vector.load %arg12[%c0_35, %c0_36] : memref<8x32xf32, #tpu.memory_space<vmem>>, vector<8x32xf32>
      %c0_37 = arith.constant 0 : index
      %c0_38 = arith.constant 0 : index
      %c0_39 = arith.constant 0 : index
      %58 = vector.load %arg11[%c0_37, %c0_38, %c0_39] : memref<1x8x32xf32, #tpu.memory_space<vmem>>, vector<1x8x32xf32>
      %59 = vector.shape_cast %58 : vector<1x8x32xf32> to vector<8x32xf32>
      %60 = vector.shape_cast %57 : vector<8x32xf32> to vector<1x8x32xf32>
      tpu.vector_store %arg11[%c0_37, %c0_38, %c0_39], %60 {strides = array<i32>} : memref<1x8x32xf32, #tpu.memory_space<vmem>>, vector<1x8x32xf32>,
    } else {
    }
    return
  }
  func.func @transform_0(%arg0: i32, %arg1: i32) -> (i32, i32, i32) {
    %c0_i32 = arith.constant 0 : i32
    %c0_i32_0 = arith.constant 0 : i32
    %c0_i32_1 = arith.constant 0 : i32
    return %arg0, %c0_i32, %c0_i32_0 : i32, i32, i32
  }
  func.func @transform_1(%arg0: i32, %arg1: i32) -> (i32, i32, i32) {
    %c0_i32 = arith.constant 0 : i32
    %c0_i32_0 = arith.constant 0 : i32
    %c0_i32_1 = arith.constant 0 : i32
    return %arg1, %c0_i32, %c0_i32_0 : i32, i32, i32
  }
  func.func @transform_2(%arg0: i32, %arg1: i32) -> (i32, i32, i32) {
    %c0_i32 = arith.constant 0 : i32
    %c0_i32_0 = arith.constant 0 : i32
    %c0_i32_1 = arith.constant 0 : i32
    return %arg1, %c0_i32, %c0_i32_0 : i32, i32, i32
  }
  func.func @transform_3(%arg0: i32, %arg1: i32) -> (i32, i32, i32) {
    %c0_i32 = arith.constant 0 : i32
    %c0_i32_0 = arith.constant 0 : i32
    %c0_i32_1 = arith.constant 0 : i32
    return %arg1, %c0_i32, %c0_i32_0 : i32, i32, i32
  }
  func.func @transform_4(%arg0: i32, %arg1: i32) -> (i32, i32, i32) {
    %c0_i32 = arith.constant 0 : i32
    %c0_i32_0 = arith.constant 0 : i32
    %c0_i32_1 = arith.constant 0 : i32
    return %arg1, %c0_i32, %c0_i32_0 : i32, i32, i32
  }
  func.func @transform_5(%arg0: i32, %arg1: i32) -> (i32, i32, i32) {
    %c0_i32 = arith.constant 0 : i32
    %c0_i32_0 = arith.constant 0 : i32
    %c0_i32_1 = arith.constant 0 : i32
    return %arg1, %c0_i32, %c0_i32_0 : i32, i32, i32
  }
  func.func @transform_6(%arg0: i32, %arg1: i32) -> (i32, i32, i32) {
    %c0_i32 = arith.constant 0 : i32
    %c0_i32_0 = arith.constant 0 : i32
    %c0_i32_1 = arith.constant 0 : i32
    return %arg1, %c0_i32, %c0_i32_0 : i32, i32, i32
  }
  func.func @transform_7(%arg0: i32, %arg1: i32) -> (i32, i32, i32) {
    %c0_i32 = arith.constant 0 : i32
    %c0_i32_0 = arith.constant 0 : i32
    %c0_i32_1 = arith.constant 0 : i32
    return %arg1, %c0_i32, %c0_i32_0 : i32, i32, i32
  }
  func.func @transform_8(%arg0: i32, %arg1: i32) -> (i32, i32) {
    %c0_i32 = arith.constant 0 : i32
    %c0_i32_0 = arith.constant 0 : i32
    %c0_i32_1 = arith.constant 0 : i32
    return %c0_i32, %c0_i32_0 : i32, i32
  }
  func.func @transform_9(%arg0: i32, %arg1: i32) -> (i32, i32, i32) {
    %c0_i32 = arith.constant 0 : i32
    %c0_i32_0 = arith.constant 0 : i32
    %c0_i32_1 = arith.constant 0 : i32
    return %arg0, %c0_i32, %c0_i32_0 : i32, i32, i32
  }
}

</mosaic_0001>

<llo_original>
// kernel: tpu_custom_call.1
$region0: #{tpu_custom_call.1}
  #allocation0 [shape = 'u32[]', space=smem, size = 0x4, offset = 0x4, fixed_abs, tag = 'smem constant byte address 0x4 - core index']
  #allocation1 [shape = 'u32[72,128]{1,0:T(1,128)}', space=vmem, size = 0x9000, scoped, tag = 'internal scratch']
  #allocation2 [shape = 'f32[8,32]{1,0:T(8,128)}', space=vmem, size = 0x1000, scoped, tag = 'scratch operand']
  %s0 = inlined_call_operand.vmem [shape: bf16[2,8,32], index: 0, kind: input, shape index: {}]
  %s1 = inlined_call_operand.vmem [shape: bf16[4,32,8], index: 1, kind: input, shape index: {}]
  %s2 = inlined_call_operand.vmem [shape: bf16[4,32,8], index: 2, kind: input, shape index: {}]
  %s3 = inlined_call_operand.vmem [shape: bf16[4,32,8], index: 3, kind: input, shape index: {}]
  %s4 = inlined_call_operand.vmem [shape: f32[4,1,8], index: 4, kind: input, shape index: {}]
  %s5 = inlined_call_operand.vmem [shape: f32[4,1,8], index: 5, kind: input, shape index: {}]
  %s6 = inlined_call_operand.vmem [shape: f32[4,1,8], index: 6, kind: input, shape index: {}]
  %s7 = inlined_call_operand.vmem [shape: bf16[4,8,32], index: 7, kind: input, shape index: {}]
  %s8 = inlined_call_operand.vmem [shape: f32[1,32], index: 8, kind: input, shape index: {}]
  %s9 = inlined_call_operand.hbm [shape: f32[2,8,32], index: 9, kind: output, shape index: {}]
  %s10 = sld [smem:[#allocation0]]
  $region81: #{tpu_custom_call.1} parent=0
    _
  %s12 = ssub.s32 1, %s10
  %s13 = scalar_select 0, %s12, %s10
  $region1: #{tpu_custom_call.1} parent=0
    #allocation3 [shape = 'u8[8192]{0}', space=vmem, size = 0x2000, scoped, tag = 'output window, operand 0']
    #allocation4 [shape = 's32[2]{0}', space=sflag, size = 0x8, scoped, tag = 'scoped memory for tpu_custom_call.1']
    %14 = vsyncpa [#allocation4], 0
    %s15 = scalar_lea.sflag [#allocation4], 1
    %16 = vsyncpa %s15, 0
    loop: start=0, step=1, limit=10
    $region2: #{tpu_custom_call.1} parent=1 // loop_pre_header
      _
    $region3: #{tpu_custom_call.1} parent=1 // loop_header
      %s18 = sphi 0, %s22
      %p19 = scmp.ge.s32.totalorder %s18, 10
      %s25 = sphi 0, %s37
      %s26 = sphi 0, %s33
      %s27 = sphi 0, %s25
      %s28 = sphi 0, %s26
      %s29 = sphi 0, %s27
      %s30 = sphi 0, %s28
      %s40 = sphi 0, %s42
      %s43 = sphi 0, %s40
      %s44 = sphi 0, %s43
      %s60 = sphi 0, %s44
      %s66 = sphi 0, %s68
      %s69 = sphi 0, %s66
      %s70 = sphi 0, %s69
      %s86 = sphi 0, %s70
      %s92 = sphi 0, %s94
      %s95 = sphi 0, %s92
      %s96 = sphi 0, %s95
      %s112 = sphi 0, %s96
      %s118 = sphi 0, %s120
      %s121 = sphi 0, %s118
      %s122 = sphi 0, %s121
      %s138 = sphi 0, %s122
      %s144 = sphi 0, %s146
      %s147 = sphi 0, %s144
      %s148 = sphi 0, %s147
      %s164 = sphi 0, %s148
      %s170 = sphi 0, %s172
      %s173 = sphi 0, %s170
      %s174 = sphi 0, %s173
      %s190 = sphi 0, %s174
      %s196 = sphi 0, %s198
      %s199 = sphi 0, %s196
      %s200 = sphi 0, %s199
      %s216 = sphi 0, %s200
      %s222 = sphi 0, %s224
      %s225 = sphi 0, %s222
      %s226 = sphi 0, %s225
      %s242 = sphi 0, %s226
      %s246 = sphi 0, %s246
      %s248 = sphi 0, %s246
      %s249 = sphi 0, %s248
      %s263 = sphi 0, %s249
      %s269 = sphi 0, %s271
      %s272 = sphi 0, %s269
      %s273 = sphi 0, %s272
      %s289 = sphi 0, %s273
    $region4: #{tpu_custom_call.1} parent=1 // loop_header_branch
      %21 = sbr.rel (%p19) target = $region8
    $region5: #{tpu_custom_call.1} parent=1 // loop_body
      %s23 = ssub.s32 %s18, 1
      %s24 = ssub.s32 %s18, 2
      %s31 = sadd.s32 1, %s26
      %p32 = scmp.ge.s32.totalorder %s31, 4
      %s33 = scalar_select %p32, 0, %s31
      %s34 = sadd.s32 1, %s25
      %s35 = scalar_select %p32, %s34, %s25
      %p36 = scmp.ge.s32.totalorder %s35, 2
      %s37 = scalar_select %p36, 0, %s35
      %s38 = ssub.s32 %s25, %s37
      %p39 = scmp.eq.s32.totalorder %s38, 0
      %s41 = sadd.s32 %s40, 1
      %s42 = scalar_select %p39, %s40, %s41
      %p45 = pneg %p39
      %p46 = scmp.eq.s32.totalorder %s18, 7
      %p47 = por %p45, %p46
      %p48 = scmp.ne.s32.totalorder %s40, %s43
      %p49 = scmp.eq.s32.totalorder %s18, 0
      %p50 = por %p48, %p49
      %p51 = scmp.ne.s32.totalorder %s40, %s43
      %p52 = scmp.eq.s32.totalorder %s23, 7
      %p53 = por %p51, %p52
      %p54 = scmp.ne.s32.totalorder %s43, %s44
      %p55 = scmp.eq.s32.totalorder %s23, 0
      %p56 = por %p54, %p55
      %p57 = scmp.ne.s32.totalorder %s43, %s44
      %p58 = scmp.eq.s32.totalorder %s24, 7
      %p59 = por %p57, %p58
      %p61 = scmp.ne.s32.totalorder %s44, %s60
      %p62 = scmp.eq.s32.totalorder %s24, 0
      %p63 = por %p61, %p62
      %s64 = ssub.s32 %s26, %s33
      %p65 = scmp.eq.s32.totalorder %s64, 0
      %s67 = sadd.s32 %s66, 1
      %s68 = scalar_select %p65, %s66, %s67
      %p71 = pneg %p65
      %p72 = scmp.eq.s32.totalorder %s18, 7
      %p73 = por %p71, %p72
      %p74 = scmp.ne.s32.totalorder %s66, %s69
      %p75 = scmp.eq.s32.totalorder %s18, 0
      %p76 = por %p74, %p75
      %p77 = scmp.ne.s32.totalorder %s66, %s69
      %p78 = scmp.eq.s32.totalorder %s23, 7
      %p79 = por %p77, %p78
      %p80 = scmp.ne.s32.totalorder %s69, %s70
      %p81 = scmp.eq.s32.totalorder %s23, 0
      %p82 = por %p80, %p81
      %p83 = scmp.ne.s32.totalorder %s69, %s70
      %p84 = scmp.eq.s32.totalorder %s24, 7
      %p85 = por %p83, %p84
      %p87 = scmp.ne.s32.totalorder %s70, %s86
      %p88 = scmp.eq.s32.totalorder %s24, 0
      %p89 = por %p87, %p88
      %s90 = ssub.s32 %s26, %s33
      %p91 = scmp.eq.s32.totalorder %s90, 0
      %s93 = sadd.s32 %s92, 1
      %s94 = scalar_select %p91, %s92, %s93
      %p97 = pneg %p91
      %p98 = scmp.eq.s32.totalorder %s18, 7
      %p99 = por %p97, %p98
      %p100 = scmp.ne.s32.totalorder %s92, %s95
      %p101 = scmp.eq.s32.totalorder %s18, 0
      %p102 = por %p100, %p101
      %p103 = scmp.ne.s32.totalorder %s92, %s95
      %p104 = scmp.eq.s32.totalorder %s23, 7
      %p105 = por %p103, %p104
      %p106 = scmp.ne.s32.totalorder %s95, %s96
      %p107 = scmp.eq.s32.totalorder %s23, 0
      %p108 = por %p106, %p107
      %p109 = scmp.ne.s32.totalorder %s95, %s96
      %p110 = scmp.eq.s32.totalorder %s24, 7
      %p111 = por %p109, %p110
      %p113 = scmp.ne.s32.totalorder %s96, %s112
      %p114 = scmp.eq.s32.totalorder %s24, 0
      %p115 = por %p113, %p114
      %s116 = ssub.s32 %s26, %s33
      %p117 = scmp.eq.s32.totalorder %s116, 0
      %s119 = sadd.s32 %s118, 1
      %s120 = scalar_select %p117, %s118, %s119
      %p123 = pneg %p117
      %p124 = scmp.eq.s32.totalorder %s18, 7
      %p125 = por %p123, %p124
      %p126 = scmp.ne.s32.totalorder %s118, %s121
      %p127 = scmp.eq.s32.totalorder %s18, 0
      %p128 = por %p126, %p127
      %p129 = scmp.ne.s32.totalorder %s118, %s121
      %p130 = scmp.eq.s32.totalorder %s23, 7
      %p131 = por %p129, %p130
      %p132 = scmp.ne.s32.totalorder %s121, %s122
      %p133 = scmp.eq.s32.totalorder %s23, 0
      %p134 = por %p132, %p133
      %p135 = scmp.ne.s32.totalorder %s121, %s122
      %p136 = scmp.eq.s32.totalorder %s24, 7
      %p137 = por %p135, %p136
      %p139 = scmp.ne.s32.totalorder %s122, %s138
      %p140 = scmp.eq.s32.totalorder %s24, 0
      %p141 = por %p139, %p140
      %s142 = ssub.s32 %s26, %s33
      %p143 = scmp.eq.s32.totalorder %s142, 0
      %s145 = sadd.s32 %s144, 1
      %s146 = scalar_select %p143, %s144, %s145
      %p149 = pneg %p143
      %p150 = scmp.eq.s32.totalorder %s18, 7
      %p151 = por %p149, %p150
      %p152 = scmp.ne.s32.totalorder %s144, %s147
      %p153 = scmp.eq.s32.totalorder %s18, 0
      %p154 = por %p152, %p153
      %p155 = scmp.ne.s32.totalorder %s144, %s147
      %p156 = scmp.eq.s32.totalorder %s23, 7
      %p157 = por %p155, %p156
      %p158 = scmp.ne.s32.totalorder %s147, %s148
      %p159 = scmp.eq.s32.totalorder %s23, 0
      %p160 = por %p158, %p159
      %p161 = scmp.ne.s32.totalorder %s147, %s148
      %p162 = scmp.eq.s32.totalorder %s24, 7
      %p163 = por %p161, %p162
      %p165 = scmp.ne.s32.totalorder %s148, %s164
      %p166 = scmp.eq.s32.totalorder %s24, 0
      %p167 = por %p165, %p166
      %s168 = ssub.s32 %s26, %s33
      %p169 = scmp.eq.s32.totalorder %s168, 0
      %s171 = sadd.s32 %s170, 1
      %s172 = scalar_select %p169, %s170, %s171
      %p175 = pneg %p169
      %p176 = scmp.eq.s32.totalorder %s18, 7
      %p177 = por %p175, %p176
      %p178 = scmp.ne.s32.totalorder %s170, %s173
      %p179 = scmp.eq.s32.totalorder %s18, 0
      %p180 = por %p178, %p179
      %p181 = scmp.ne.s32.totalorder %s170, %s173
      %p182 = scmp.eq.s32.totalorder %s23, 7
      %p183 = por %p181, %p182
      %p184 = scmp.ne.s32.totalorder %s173, %s174
      %p185 = scmp.eq.s32.totalorder %s23, 0
      %p186 = por %p184, %p185
      %p187 = scmp.ne.s32.totalorder %s173, %s174
      %p188 = scmp.eq.s32.totalorder %s24, 7
      %p189 = por %p187, %p188
      %p191 = scmp.ne.s32.totalorder %s174, %s190
      %p192 = scmp.eq.s32.totalorder %s24, 0
      %p193 = por %p191, %p192
      %s194 = ssub.s32 %s26, %s33
      %p195 = scmp.eq.s32.totalorder %s194, 0
      %s197 = sadd.s32 %s196, 1
      %s198 = scalar_select %p195, %s196, %s197
      %p201 = pneg %p195
      %p202 = scmp.eq.s32.totalorder %s18, 7
      %p203 = por %p201, %p202
      %p204 = scmp.ne.s32.totalorder %s196, %s199
      %p205 = scmp.eq.s32.totalorder %s18, 0
      %p206 = por %p204, %p205
      %p207 = scmp.ne.s32.totalorder %s196, %s199
      %p208 = scmp.eq.s32.totalorder %s23, 7
      %p209 = por %p207, %p208
      %p210 = scmp.ne.s32.totalorder %s199, %s200
      %p211 = scmp.eq.s32.totalorder %s23, 0
      %p212 = por %p210, %p211
      %p213 = scmp.ne.s32.totalorder %s199, %s200
      %p214 = scmp.eq.s32.totalorder %s24, 7
      %p215 = por %p213, %p214
      %p217 = scmp.ne.s32.totalorder %s200, %s216
      %p218 = scmp.eq.s32.totalorder %s24, 0
      %p219 = por %p217, %p218
      %s220 = ssub.s32 %s26, %s33
      %p221 = scmp.eq.s32.totalorder %s220, 0
      %s223 = sadd.s32 %s222, 1
      %s224 = scalar_select %p221, %s222, %s223
      %p227 = pneg %p221
      %p228 = scmp.eq.s32.totalorder %s18, 7
      %p229 = por %p227, %p228
      %p230 = scmp.ne.s32.totalorder %s222, %s225
      %p231 = scmp.eq.s32.totalorder %s18, 0
      %p232 = por %p230, %p231
      %p233 = scmp.ne.s32.totalorder %s222, %s225
      %p234 = scmp.eq.s32.totalorder %s23, 7
      %p235 = por %p233, %p234
      %p236 = scmp.ne.s32.totalorder %s225, %s226
      %p237 = scmp.eq.s32.totalorder %s23, 0
      %p238 = por %p236, %p237
      %p239 = scmp.ne.s32.totalorder %s225, %s226
      %p240 = scmp.eq.s32.totalorder %s24, 7
      %p241 = por %p239, %p240
      %p243 = scmp.ne.s32.totalorder %s226, %s242
      %p244 = scmp.eq.s32.totalorder %s24, 0
      %p245 = por %p243, %p244
      %s247 = sadd.s32 %s246, 1
      %p250 = scmp.eq.s32.totalorder %s18, 7
      %p251 = scmp.ne.s32.totalorder %s246, %s248
      %p252 = scmp.eq.s32.totalorder %s18, 0
      %p253 = por %p251, %p252
      %p254 = scmp.ne.s32.totalorder %s246, %s248
      %p255 = scmp.eq.s32.totalorder %s23, 7
      %p256 = por %p254, %p255
      %p257 = scmp.ne.s32.totalorder %s248, %s249
      %p258 = scmp.eq.s32.totalorder %s23, 0
      %p259 = por %p257, %p258
      %p260 = scmp.ne.s32.totalorder %s248, %s249
      %p261 = scmp.eq.s32.totalorder %s24, 7
      %p262 = por %p260, %p261
      %p264 = scmp.ne.s32.totalorder %s249, %s263
      %p265 = scmp.eq.s32.totalorder %s24, 0
      %p266 = por %p264, %p265
      %s267 = ssub.s32 %s25, %s37
      %p268 = scmp.eq.s32.totalorder %s267, 0
      %s270 = sadd.s32 %s269, 1
      %s271 = scalar_select %p268, %s269, %s270
      %p274 = pneg %p268
      %p275 = scmp.eq.s32.totalorder %s18, 7
      %p276 = por %p274, %p275
      %p277 = scmp.ne.s32.totalorder %s269, %s272
      %p278 = scmp.eq.s32.totalorder %s18, 0
      %p279 = por %p277, %p278
      %p280 = scmp.ne.s32.totalorder %s269, %s272
      %p281 = scmp.eq.s32.totalorder %s23, 7
      %p282 = por %p280, %p281
      %p283 = scmp.ne.s32.totalorder %s272, %s273
      %p284 = scmp.eq.s32.totalorder %s23, 0
      %p285 = por %p283, %p284
      %p286 = scmp.ne.s32.totalorder %s272, %s273
      %p287 = scmp.eq.s32.totalorder %s24, 7
      %p288 = por %p286, %p287
      %p290 = scmp.ne.s32.totalorder %s273, %s289
      %p291 = scmp.eq.s32.totalorder %s24, 0
      %p292 = por %p290, %p291
      %p293 = scmp.le.s32.totalorder 1, %s18
      %p294 = scmp.lt.s32.totalorder %s18, 9
      %p295 = pnand %p293, %p294
      %p296 = pneg %p295
      // Predicated region
      $region9: #{tpu_custom_call.1} parent=5 // pred_check
        _
      $region10: #{tpu_custom_call.1} parent=5 // pred_check_branch
        %298 = sbr.rel (%p295) target = $region12
      $region11: #{tpu_custom_call.1} parent=5 // pred_region
        %s299 = ssub.s32 %s18, 1
        // Predicated region
        $region13: #{tpu_custom_call.1} parent=11 // pred_check
          %p300 = pneg %p259
        $region14: #{tpu_custom_call.1} parent=11 // pred_check_branch
          %302 = sbr.rel (%p300) target = $region16
        $region15: #{tpu_custom_call.1} parent=11 // pred_region
          _
        $region16: #{tpu_custom_call.1} parent=11 // pred_fallthru
          _
      $region12: #{tpu_custom_call.1} parent=5 // pred_fallthru
        _
      %p303 = scmp.lt.s32.totalorder %s18, 8
      // Predicated region
      $region17: #{tpu_custom_call.1} parent=5 // pred_check
        %p304 = pneg %p303
      $region18: #{tpu_custom_call.1} parent=5 // pred_check_branch
        %306 = sbr.rel (%p304) target = $region20
      $region19: #{tpu_custom_call.1} parent=5 // pred_region
        // Predicated region
        $region21: #{tpu_custom_call.1} parent=19 // pred_check
          %p307 = pneg %p50
        $region22: #{tpu_custom_call.1} parent=19 // pred_check_branch
          %309 = sbr.rel (%p307) target = $region24
        $region23: #{tpu_custom_call.1} parent=19 // pred_region
          %p310 = scmp.lt.s32.totalorder %s25, 1
          %s311 = scalar_select %p310, %s25, 1
          %s312 = smul.addr %s311, 4
          %s313 = scalar_lea.vmem %s0, %s312
        $region24: #{tpu_custom_call.1} parent=19 // pred_fallthru
          _
        // Predicated region
        $region25: #{tpu_custom_call.1} parent=19 // pred_check
          %p314 = pneg %p76
        $region26: #{tpu_custom_call.1} parent=19 // pred_check_branch
          %316 = sbr.rel (%p314) target = $region28
        $region27: #{tpu_custom_call.1} parent=19 // pred_region
          %p317 = scmp.lt.s32.totalorder %s26, 3
          %s318 = scalar_select %p317, %s26, 3
          %s319 = smul.addr %s318, 4
          %s320 = smul.addr %s319, 4
          %s321 = scalar_lea.vmem %s1, %s320
        $region28: #{tpu_custom_call.1} parent=19 // pred_fallthru
          _
        // Predicated region
        $region29: #{tpu_custom_call.1} parent=19 // pred_check
          %p322 = pneg %p102
        $region30: #{tpu_custom_call.1} parent=19 // pred_check_branch
          %324 = sbr.rel (%p322) target = $region32
        $region31: #{tpu_custom_call.1} parent=19 // pred_region
          %p325 = scmp.lt.s32.totalorder %s26, 3
          %s326 = scalar_select %p325, %s26, 3
          %s327 = smul.addr %s326, 4
          %s328 = smul.addr %s327, 4
          %s329 = scalar_lea.vmem %s2, %s328
        $region32: #{tpu_custom_call.1} parent=19 // pred_fallthru
          _
        // Predicated region
        $region33: #{tpu_custom_call.1} parent=19 // pred_check
          %p330 = pneg %p128
        $region34: #{tpu_custom_call.1} parent=19 // pred_check_branch
          %332 = sbr.rel (%p330) target = $region36
        $region35: #{tpu_custom_call.1} parent=19 // pred_region
          %p333 = scmp.lt.s32.totalorder %s26, 3
          %s334 = scalar_select %p333, %s26, 3
          %s335 = smul.addr %s334, 4
          %s336 = smul.addr %s335, 4
          %s337 = scalar_lea.vmem %s3, %s336
        $region36: #{tpu_custom_call.1} parent=19 // pred_fallthru
          _
        // Predicated region
        $region37: #{tpu_custom_call.1} parent=19 // pred_check
          %p338 = pneg %p154
        $region38: #{tpu_custom_call.1} parent=19 // pred_check_branch
          %340 = sbr.rel (%p338) target = $region40
        $region39: #{tpu_custom_call.1} parent=19 // pred_region
          %p341 = scmp.lt.s32.totalorder %s26, 3
          %s342 = scalar_select %p341, %s26, 3
          %s343 = scalar_lea.vmem %s4, %s342
        $region40: #{tpu_custom_call.1} parent=19 // pred_fallthru
          _
        // Predicated region
        $region41: #{tpu_custom_call.1} parent=19 // pred_check
          %p344 = pneg %p180
        $region42: #{tpu_custom_call.1} parent=19 // pred_check_branch
          %346 = sbr.rel (%p344) target = $region44
        $region43: #{tpu_custom_call.1} parent=19 // pred_region
          %p347 = scmp.lt.s32.totalorder %s26, 3
          %s348 = scalar_select %p347, %s26, 3
          %s349 = scalar_lea.vmem %s5, %s348
        $region44: #{tpu_custom_call.1} parent=19 // pred_fallthru
          _
        // Predicated region
        $region45: #{tpu_custom_call.1} parent=19 // pred_check
          %p350 = pneg %p206
        $region46: #{tpu_custom_call.1} parent=19 // pred_check_branch
          %352 = sbr.rel (%p350) target = $region48
        $region47: #{tpu_custom_call.1} parent=19 // pred_region
          %p353 = scmp.lt.s32.totalorder %s26, 3
          %s354 = scalar_select %p353, %s26, 3
          %s355 = scalar_lea.vmem %s6, %s354
        $region48: #{tpu_custom_call.1} parent=19 // pred_fallthru
          _
        // Predicated region
        $region49: #{tpu_custom_call.1} parent=19 // pred_check
          %p356 = pneg %p232
        $region50: #{tpu_custom_call.1} parent=19 // pred_check_branch
          %358 = sbr.rel (%p356) target = $region52
        $region51: #{tpu_custom_call.1} parent=19 // pred_region
          %p359 = scmp.lt.s32.totalorder %s26, 3
          %s360 = scalar_select %p359, %s26, 3
          %s361 = smul.addr %s360, 4
          %s362 = scalar_lea.vmem %s7, %s361
        $region52: #{tpu_custom_call.1} parent=19 // pred_fallthru
          _
      $region20: #{tpu_custom_call.1} parent=5 // pred_fallthru
        _
      %p363 = scmp.le.s32.totalorder 1, %s18
      %p364 = scmp.lt.s32.totalorder %s18, 9
      %p365 = pnand %p363, %p364
      %p366 = pneg %p365
      // Predicated region
      $region53: #{tpu_custom_call.1} parent=5 // pred_check
        _
      $region54: #{tpu_custom_call.1} parent=5 // pred_check_branch
        %368 = sbr.rel (%p365) target = $region56
      $region55: #{tpu_custom_call.1} parent=5 // pred_region
        %s369 = ssub.s32 %s18, 1
        %p370 = scmp.lt.s32.totalorder %s27, 1
        %s371 = scalar_select %p370, %s27, 1
        %s372 = smul.addr %s371, 4
        %s373 = scalar_lea.vmem %s0, %s372
        %p374 = pneg %p56
        %p375 = pneg %p53
        %p376 = scmp.lt.s32.totalorder %s28, 3
        %s377 = scalar_select %p376, %s28, 3
        %s378 = smul.addr %s377, 4
        %s379 = smul.addr %s378, 4
        %s380 = scalar_lea.vmem %s1, %s379
        %p381 = pneg %p82
        %p382 = pneg %p79
        %p383 = scmp.lt.s32.totalorder %s28, 3
        %s384 = scalar_select %p383, %s28, 3
        %s385 = smul.addr %s384, 4
        %s386 = smul.addr %s385, 4
        %s387 = scalar_lea.vmem %s2, %s386
        %p388 = pneg %p108
        %p389 = pneg %p105
        %p390 = scmp.lt.s32.totalorder %s28, 3
        %s391 = scalar_select %p390, %s28, 3
        %s392 = smul.addr %s391, 4
        %s393 = smul.addr %s392, 4
        %s394 = scalar_lea.vmem %s3, %s393
        %p395 = pneg %p134
        %p396 = pneg %p131
        %p397 = scmp.lt.s32.totalorder %s28, 3
        %s398 = scalar_select %p397, %s28, 3
        %s399 = scalar_lea.vmem %s4, %s398
        %p400 = pneg %p160
        %p401 = pneg %p157
        %p402 = scmp.lt.s32.totalorder %s28, 3
        %s403 = scalar_select %p402, %s28, 3
        %s404 = scalar_lea.vmem %s5, %s403
        %p405 = pneg %p186
        %p406 = pneg %p183
        %p407 = scmp.lt.s32.totalorder %s28, 3
        %s408 = scalar_select %p407, %s28, 3
        %s409 = scalar_lea.vmem %s6, %s408
        %p410 = pneg %p212
        %p411 = pneg %p209
        %p412 = scmp.lt.s32.totalorder %s28, 3
        %s413 = scalar_select %p412, %s28, 3
        %s414 = smul.addr %s413, 4
        %s415 = scalar_lea.vmem %s7, %s414
        %p416 = pneg %p238
        %p417 = pneg %p235
        %p418 = pneg %p259
        %p419 = pneg %p256
        %p420 = pneg %p285
        %p421 = pneg %p282
        %s422 = sand.u32 %s272, 1
        %s423 = scalar_lea.sflag [#allocation4], %s422
        %s424 = sand.u32 %s272, 1
        %s425 = smul.addr %s424, 8
        %s426 = scalar_lea.vmem [#allocation3], %s425
        %p427 = scmp.lt.s32.totalorder %s27, 1
        %s428 = scalar_select %p427, %s27, 1
        %s429 = smul.addr %s428, 4
        %s430 = scalar_lea.vmem %s0, %s429
        %p431 = scmp.lt.s32.totalorder %s28, 3
        %s432 = scalar_select %p431, %s28, 3
        %s433 = smul.addr %s432, 4
        %s434 = smul.addr %s433, 4
        %s435 = scalar_lea.vmem %s1, %s434
        %p436 = scmp.lt.s32.totalorder %s28, 3
        %s437 = scalar_select %p436, %s28, 3
        %s438 = smul.addr %s437, 4
        %s439 = smul.addr %s438, 4
        %s440 = scalar_lea.vmem %s2, %s439
        %p441 = scmp.lt.s32.totalorder %s28, 3
        %s442 = scalar_select %p441, %s28, 3
        %s443 = smul.addr %s442, 4
        %s444 = smul.addr %s443, 4
        %s445 = scalar_lea.vmem %s3, %s444
        %p446 = scmp.lt.s32.totalorder %s28, 3
        %s447 = scalar_select %p446, %s28, 3
        %s448 = scalar_lea.vmem %s4, %s447
        %p449 = scmp.lt.s32.totalorder %s28, 3
        %s450 = scalar_select %p449, %s28, 3
        %s451 = scalar_lea.vmem %s5, %s450
        %p452 = scmp.lt.s32.totalorder %s28, 3
        %s453 = scalar_select %p452, %s28, 3
        %s454 = scalar_lea.vmem %s6, %s453
        %p455 = scmp.lt.s32.totalorder %s28, 3
        %s456 = scalar_select %p455, %s28, 3
        %s457 = smul.addr %s456, 4
        %s458 = scalar_lea.vmem %s7, %s457
        %v460 = vld [vmem:[%s430] sm:$0xf]
        %v461 = vld [vmem:[%s435] sm:$0xf]
        %v462 = vld [vmem:[%s435 + $0x4] sm:$0xf]
        %v463 = vld [vmem:[%s435 + $0x8] sm:$0xf]
        %v464 = vld [vmem:[%s435 + $0xc] sm:$0xf]
        %v465 = vld [vmem:[%s448] sm:$0x1]
        %v467 = vperm.slane %v465, 0
        %v473 = vunpack.c.l.b16 %v461
        %v474 = vunpack.c.l.b16 %v462
        %v475 = vunpack.c.l.b16 %v463
        %v476 = vunpack.c.l.b16 %v464
        %v477 = vpack.c.b16 %v474, %v473
        %v478 = vpack.c.b16 %v476, %v475
        %vm481 = vcmask 261120
        %v483 = vsel %vm481, %v460, 0
        %485 = vmatpush.bf16.msra.mxu0 0
        %486 = vmatpush.bf16.msra.mxu0 0
        %487 = vmatpush.bf16.msra.mxu0 0
        %488 = vmatpush.bf16.msra.mxu0 0
        %489 = vmatpush.bf16.msra.mxu0 0
        %490 = vmatpush.bf16.msra.mxu0 0
        %491 = vmatpush.bf16.msra.mxu0 %v478
        %492 = vmatpush.bf16.msra.mxu0 %v477
        %493 = vmatmul.bf16.gmra.mxu0 %v483
        %v494 = vpop.f32.mrf.mxu0
        %v495 = vadd.f32 %v467, %v494
        %v496 = vpop.f32.mrf.mxu0
        %497 = vdwg.mxu0
        %v498 = vld [vmem:[%s440] sm:$0xf]
        %v499 = vld [vmem:[%s440 + $0x4] sm:$0xf]
        %v500 = vld [vmem:[%s440 + $0x8] sm:$0xf]
        %v501 = vld [vmem:[%s440 + $0xc] sm:$0xf]
        %v502 = vld [vmem:[%s451] sm:$0x1]
        %v504 = vperm.slane %v502, 0
        %v510 = vunpack.c.l.b16 %v498
        %v511 = vunpack.c.l.b16 %v499
        %v512 = vunpack.c.l.b16 %v500
        %v513 = vunpack.c.l.b16 %v501
        %v514 = vpack.c.b16 %v511, %v510
        %v515 = vpack.c.b16 %v513, %v512
        %518 = vmatpush.bf16.msra.mxu0 0
        %519 = vmatpush.bf16.msra.mxu0 0
        %520 = vmatpush.bf16.msra.mxu0 0
        %521 = vmatpush.bf16.msra.mxu0 0
        %522 = vmatpush.bf16.msra.mxu0 0
        %523 = vmatpush.bf16.msra.mxu0 0
        %524 = vmatpush.bf16.msra.mxu0 %v515
        %525 = vmatpush.bf16.msra.mxu0 %v514
        %526 = vmatmul.bf16.gmra.mxu0 %v483
        %v527 = vpop.f32.mrf.mxu0
        %v528 = vadd.f32 %v504, %v527
        %v529 = vpop.f32.mrf.mxu0
        %530 = vdwg.mxu0
        %v531 = vld [vmem:[%s445] sm:$0xf]
        %v532 = vld [vmem:[%s445 + $0x4] sm:$0xf]
        %v533 = vld [vmem:[%s445 + $0x8] sm:$0xf]
        %v534 = vld [vmem:[%s445 + $0xc] sm:$0xf]
        %v535 = vld [vmem:[%s454] sm:$0x1]
        %v537 = vperm.slane %v535, 0
        %v543 = vunpack.c.l.b16 %v531
        %v544 = vunpack.c.l.b16 %v532
        %v545 = vunpack.c.l.b16 %v533
        %v546 = vunpack.c.l.b16 %v534
        %v547 = vpack.c.b16 %v544, %v543
        %v548 = vpack.c.b16 %v546, %v545
        %551 = vmatpush.bf16.msra.mxu0 0
        %552 = vmatpush.bf16.msra.mxu0 0
        %553 = vmatpush.bf16.msra.mxu0 0
        %554 = vmatpush.bf16.msra.mxu0 0
        %555 = vmatpush.bf16.msra.mxu0 0
        %556 = vmatpush.bf16.msra.mxu0 0
        %557 = vmatpush.bf16.msra.mxu0 %v548
        %558 = vmatpush.bf16.msra.mxu0 %v547
        %559 = vmatmul.bf16.gmra.mxu0 %v483
        %v560 = vpop.f32.mrf.mxu0
        %v561 = vadd.f32 %v537, %v560
        %v562 = vpop.f32.mrf.mxu0
        %563 = vdwg.mxu0
        %v564 = vpack.c.bf16 %v495, %v495
        %v565 = vpack.c.bf16 %v528, %v528
        %vm566 = vcmask 64512
        %v568 = vsel %vm566, %v564, 0
        %v571 = vsel %vm566, %v565, 0
        %573 = vmatpush.bf16.xpose.msra.mxu0 0
        %574 = vmatpush.bf16.xpose.msra.mxu0 0
        %575 = vmatpush.bf16.xpose.msra.mxu0 0
        %576 = vmatpush.bf16.xpose.msra.mxu0 0
        %577 = vmatpush.bf16.xpose.msra.mxu0 0
        %578 = vmatpush.bf16.xpose.msra.mxu0 0
        %579 = vmatpush.bf16.xpose.msra.mxu0 0
        %580 = vmatpush.bf16.xpose.msra.mxu0 %v571
        %581 = vmatmul.bf16.gmra.mxu0 %v568
        %v582 = vpop.f32.mrf.mxu0
        %v583 = vadd.f32 0.0, %v582
        %v584 = vpop.f32.mrf.mxu0
        %585 = vdwg.mxu0
        %v586 = vlaneseq
        %v587 = vshrl.u32 %v586, 7
        %v588 = vlaneseq
        %v589 = vand.u32 %v588, 127
        %vm590 = vcmp.ge.s32.totalorder %v587, %v589
        %v591 = vsel %vm590, %v583, -inf
        %v592 = vsel %vm566, %v591, -inf
        %593 = vmax.xlane.f32.xlu0 %v592
        %v594 = vpop.xlane.xlu0 %593
        %v595 = vsub.f32 %v591, %v594
        %v596 = vmul.f32 %v595, 1.442695
        %v597 = vpow.pop %v596
        %v598 = vsel %vm566, %v597, 0.0
        %599 = vadd.xlane.f32.xlu0 %v598
        %v600 = vpop.xlane.xlu0 %599
        %v601 = vrcp.pop %v600
        %v602 = vmul.f32 %v597, %v601
        %v603 = vpack.c.bf16 %v602, %v602
        %v604 = vpack.c.bf16 %v561, %v561
        %v606 = vsel %vm566, %v603, 0
        %vm608 = vcmask 1043456
        %v610 = vsel %vm608, %v604, 0
        %612 = vmatpush.bf16.msra.mxu0 0
        %613 = vmatpush.bf16.msra.mxu0 0
        %614 = vmatpush.bf16.msra.mxu0 0
        %615 = vmatpush.bf16.msra.mxu0 0
        %616 = vmatpush.bf16.msra.mxu0 0
        %617 = vmatpush.bf16.msra.mxu0 0
        %618 = vmatpush.bf16.msra.mxu0 0
        %619 = vmatpush.bf16.msra.mxu0 %v610
        %620 = vmatmul.bf16.gmra.mxu0 %v606
        %v621 = vpop.f32.mrf.mxu0
        %v622 = vadd.f32 0.0, %v621
        %v623 = vpop.f32.mrf.mxu0
        %624 = vdwg.mxu0
        %v625 = vpack.c.bf16 %v622, %v622
        %v626 = vld [vmem:[%s458] sm:$0xf]
        %v628 = vsel %vm566, %v625, 0
        %v631 = vsel %vm608, %v626, 0
        %633 = vmatpush.bf16.msra.mxu0 0
        %634 = vmatpush.bf16.msra.mxu0 0
        %635 = vmatpush.bf16.msra.mxu0 0
        %636 = vmatpush.bf16.msra.mxu0 0
        %637 = vmatpush.bf16.msra.mxu0 0
        %638 = vmatpush.bf16.msra.mxu0 0
        %639 = vmatpush.bf16.msra.mxu0 0
        %640 = vmatpush.bf16.msra.mxu0 %v631
        %641 = vmatmul.bf16.gmra.mxu0 %v628
        %v642 = vpop.f32.mrf.mxu0
        %v643 = vadd.f32 0.0, %v642
        %v644 = vpop.f32.mrf.mxu0
        %645 = vdwg.mxu0
        %p646 = scmp.eq.s32.totalorder %s28, 0
        // Predicated region
        $region57: #{tpu_custom_call.1} parent=55 // pred_check
          %p647 = pneg %p646
        $region58: #{tpu_custom_call.1} parent=55 // pred_check_branch
          %649 = sbr.rel (%p647) target = $region60
        $region59: #{tpu_custom_call.1} parent=55 // pred_region
          %v650 = vld [vmem:[%s8] sm:$0x1]
          %v652 = vperm.slane %v650, 0
          %v654 = vadd.f32 %v652, %v643
          %655 = vst.msk [vmem:[#allocation2] sm:$0xff] %vm481, %v654
        $region60: #{tpu_custom_call.1} parent=55 // pred_fallthru
          _
        %p656 = scmp.gt.s32.totalorder %s28, 0
        // Predicated region
        $region61: #{tpu_custom_call.1} parent=55 // pred_check
          %p657 = pneg %p656
        $region62: #{tpu_custom_call.1} parent=55 // pred_check_branch
          %659 = sbr.rel (%p657) target = $region64
        $region63: #{tpu_custom_call.1} parent=55 // pred_region
          %v660 = vld [vmem:[#allocation2] sm:$0xff]
          %v661 = vadd.f32 %v660, %v643
          %662 = vst.msk [vmem:[#allocation2] sm:$0xff] %vm481, %v661
        $region64: #{tpu_custom_call.1} parent=55 // pred_fallthru
          _
        %p663 = scmp.eq.s32.totalorder %s28, 3
        // Predicated region
        $region65: #{tpu_custom_call.1} parent=55 // pred_check
          %p664 = pneg %p663
        $region66: #{tpu_custom_call.1} parent=55 // pred_check_branch
          %666 = sbr.rel (%p664) target = $region68
        $region67: #{tpu_custom_call.1} parent=55 // pred_region
          %v667 = vld [vmem:[#allocation2] sm:$0xff]
          %668 = vst.msk [vmem:[%s426] sm:$0xff] %vm481, %v667
        $region68: #{tpu_custom_call.1} parent=55 // pred_fallthru
          _
        %s669 = sand.u32 %s272, 1
        %s670 = scalar_lea.sflag [#allocation4], %s669
        %s671 = sand.u32 %s272, 1
        %s672 = smul.addr %s671, 8
        %s673 = scalar_lea.vmem [#allocation3], %s672
        // Predicated region
        $region69: #{tpu_custom_call.1} parent=55 // pred_check
          %p674 = pneg %p282
        $region70: #{tpu_custom_call.1} parent=55 // pred_check_branch
          %676 = sbr.rel (%p674) target = $region72
        $region71: #{tpu_custom_call.1} parent=55 // pred_region
          %678 = vsyncadd %s670, 0
          %s679 = smul.addr %s27, 8
          %s680 = scalar_lea.hbm %s9, %s679
          %s682 = sshll.u32 %s673, 4
          %s683 = int_to_ptr.vmem [resolvable:$true] %s682
          %s684 = sshll.u32 %s680, 4
          %s685 = int_to_ptr.hbm [resolvable:$true] %s684
          %687 = dma.vmem_to_hbm [thread:$0]  %s683, 128, %s685, %s670
        $region72: #{tpu_custom_call.1} parent=55 // pred_fallthru
          _
      $region56: #{tpu_custom_call.1} parent=5 // pred_fallthru
        _
      %p688 = scmp.le.s32.totalorder 2, %s18
      // Predicated region
      $region73: #{tpu_custom_call.1} parent=5 // pred_check
        %p689 = pneg %p688
      $region74: #{tpu_custom_call.1} parent=5 // pred_check_branch
        %691 = sbr.rel (%p689) target = $region76
      $region75: #{tpu_custom_call.1} parent=5 // pred_region
        %s692 = ssub.s32 %s18, 2
        // Predicated region
        $region77: #{tpu_custom_call.1} parent=75 // pred_check
          %p693 = pneg %p288
        $region78: #{tpu_custom_call.1} parent=75 // pred_check_branch
          %695 = sbr.rel (%p693) target = $region80
        $region79: #{tpu_custom_call.1} parent=75 // pred_region
          %s696 = sand.u32 %s273, 1
          %s697 = scalar_lea.sflag [#allocation4], %s696
          %s698 = sand.u32 %s273, 1
          %s699 = smul.addr %s698, 8
          %s700 = scalar_lea.vmem [#allocation3], %s699
          %702 = dma.done %s697, 128
        $region80: #{tpu_custom_call.1} parent=75 // pred_fallthru
          _
      $region76: #{tpu_custom_call.1} parent=5 // pred_fallthru
        _
    $region6: #{tpu_custom_call.1} parent=1 // loop_footer
      %s22 = sadd.s32 1, %s18
    $region7: #{tpu_custom_call.1} parent=1 // loop_footer_branch
      %17 = sbr.rel target = $region3
    $region8: #{tpu_custom_call.1} parent=1 // loop_exit
      _
    %703 = vsyncpa [#allocation4], 1
    %s704 = scalar_lea.sflag [#allocation4], 1
    %705 = vsyncpa %s704, 1

</llo_original>
